<compile_context>
chip_gen: v5e
topology: v5e:2x2
jax: 0.10.0
libtpu: 0.0.40
codegen_flags: <defaults>
</compile_context>

<pallas_src>
import jax
import jax.numpy as jnp
from jax.experimental import pallas as pl
from jax.experimental.pallas import tpu as pltpu


def _round_up(x, m):
    return (x + m - 1) // m * m


def center_loss_kernel(x_ref, labels_ref, centers_ref, out_ref):
    """One batch tile.

    x_ref:       (TB, D_pad)    VMEM — feature tile (zero-padded in D / batch).
    labels_ref:  (TB, 1)        VMEM int32 — clamped labels for this tile.
    centers_ref: (C_pad, D_pad) VMEM — padded center table (block index is
                                 constant across the grid -> fetched once).
    out_ref:     (TB, 1)        VMEM f32 — per-sample clamped squared distance.
    """
    tb = x_ref.shape[0]
    c_pad = centers_ref.shape[0]

    # Gather centers[labels] as a one-hot matmul on the (otherwise idle) MXU:
    # no per-row DMAs, no semaphores, fully pipelined by BlockSpec.
    cls = jax.lax.broadcasted_iota(jnp.int32, (tb, c_pad), 1)
    one_hot = (labels_ref[...] == cls).astype(jnp.float32)            # (TB, C_pad)
    c_sel = jnp.dot(one_hot, centers_ref[...].astype(jnp.float32),
                    preferred_element_type=jnp.float32,
                    precision=jax.lax.Precision.HIGHEST)              # (TB, D_pad)

    diff = x_ref[...].astype(jnp.float32) - c_sel                     # (TB, D_pad)
    d = jnp.sum(diff * diff, axis=1, keepdims=True)                   # (TB, 1)
    out_ref[...] = jnp.clip(d, 1e-12, 1e12)                           # torch .clamp


def center_loss(x, centers, labels, *, batch_tile=128):
    """x: (B, D) float, centers: (C, D) float, labels: (B,) int -> scalar f32."""
    B, D = x.shape
    C, Dc = centers.shape
    assert D == Dc

    D_pad = _round_up(D, 128)                 # lane-dense feature dim
    C_pad = _round_up(C, 128)                 # lane-dense one-hot / MXU-friendly
    TB = min(batch_tile, _round_up(B, 8))     # batch tile (multiple of 8 sublanes)
    B_pad = _round_up(B, TB)
    num_tiles = B_pad // TB

    # Zero-padded, dtype-preserving inputs (padded D columns contribute 0 to
    # the distance; padded batch rows are sliced away below).
    x_p = jnp.zeros((B_pad, D_pad), x.dtype).at[:B, :D].set(x)
    centers_p = jnp.zeros((C_pad, D_pad), centers.dtype).at[:C, :D].set(centers)
    labels_p = jnp.zeros((B_pad, 1), jnp.int32).at[:B, 0].set(
        jnp.clip(labels.astype(jnp.int32), 0, C - 1))                 # OOB safety

    # Explicit VMEM budget: resident centers + double-buffered x/label/out
    # tiles + slack; kept well under v7x's 64 MiB physical VMEM.
    itemsize = jnp.dtype(x.dtype).itemsize
    vmem_bytes = (C_pad * D_pad * jnp.dtype(centers.dtype).itemsize * 2
                  + TB * D_pad * itemsize * 4
                  + TB * 4 * 4
                  + (4 << 20))
    vmem_bytes = int(min(max(vmem_bytes, 8 << 20), 60 << 20))
    # TODO(synk): if the padded centers table ever exceeds this budget, fall
    # back to a K-tiled (class-chunked) gather instead of a resident table.

    per_sample = pl.pallas_call(
        center_loss_kernel,
        out_shape=jax.ShapeDtypeStruct((B_pad, 1), jnp.float32),
        grid_spec=pltpu.PrefetchScalarGridSpec(
            num_scalar_prefetch=0,
            grid=(num_tiles,),
            in_specs=[
                pl.BlockSpec((TB, D_pad), lambda i: (i, 0)),          # x tile
                pl.BlockSpec((TB, 1), lambda i: (i, 0)),              # labels tile
                pl.BlockSpec((C_pad, D_pad), lambda i: (0, 0)),       # centers (resident)
            ],
            out_specs=pl.BlockSpec((TB, 1), lambda i: (i, 0)),
        ),
        compiler_params=pltpu.CompilerParams(
            dimension_semantics=("parallel",),                        # v7x: 2 TCs
            vmem_limit_bytes=vmem_bytes,
        ),
    )(x_p, labels_p, centers_p)

    # Tiny finalize in the wrapper: drop padded rows, mean over the batch.
    return jnp.mean(per_sample[:B, 0])


def center_loss_ref(x, centers, labels):
    # Pure-JAX reference matching the PyTorch module (expanded distmat + gather).
    x = x.astype(jnp.float32)
    c = centers.astype(jnp.float32)
    distmat = (jnp.sum(x * x, axis=1, keepdims=True)
               + jnp.sum(c * c, axis=1)[None, :]
               - 2.0 * x @ c.T)
    sel = jnp.take_along_axis(distmat, labels.astype(jnp.int32)[:, None], axis=1)
    sel = jnp.clip(sel, 1e-12, 1e12)
    return jnp.mean(sel)


if __name__ == "__main__":
    # Module config (synthetic, deterministic): num_classes=10, feat_dim=32, batch=8
    num_classes = 10
    feat_dim = 32
    batch = 8

    key = jax.random.PRNGKey(0)
    kx, kc, kl = jax.random.split(key, 3)

    x = jax.random.normal(kx, (batch, feat_dim), dtype=jnp.float32)
    centers = jax.random.normal(kc, (num_classes, feat_dim), dtype=jnp.float32)
    labels = jax.random.randint(kl, (batch,), 0, num_classes, dtype=jnp.int32)

    loss = center_loss(x, centers, labels)
    jax.block_until_ready(loss)

    ref = center_loss_ref(x, centers, labels)
    assert jnp.allclose(loss, ref, rtol=1e-4, atol=1e-4), (loss, ref)

    print("KERNEL_OK")
</pallas_src>

<mosaic_0001>
module attributes {stable_mosaic.version = 11 : i64} {
  func.func @center_loss_kernel(%arg0: i32, %arg1: memref<8x128xf32, #tpu.memory_space<vmem>>, %arg2: memref<8x1xi32, #tpu.memory_space<vmem>>, %arg3: memref<128x128xf32, #tpu.memory_space<vmem>>, %arg4: memref<8x1xf32, #tpu.memory_space<vmem>>) attributes {dimension_semantics = [#tpu.dimension_semantics<parallel>], iteration_bounds = array<i64: 1>, scalar_prefetch = 0 : i64, scratch_operands = 0 : i64, tpu.core_type = #tpu.core_type<tc>, window_params = [{transform_indices = @transform_0, window_bounds = array<i64: 8, 128>}, {transform_indices = @transform_1, window_bounds = array<i64: 8, 1>}, {pipeline_mode = #tpu.pipeline_mode<synchronous>, transform_indices = @transform_2, window_bounds = array<i64: 128, 128>}, {transform_indices = @transform_3, window_bounds = array<i64: 8, 1>}]} {
    %0 = tpu.iota {dimensions = array<i32: 1>} : vector<8x128xi32>
    %c0 = arith.constant 0 : index
    %c0_0 = arith.constant 0 : index
    %1 = vector.load %arg2[%c0, %c0_0] : memref<8x1xi32, #tpu.memory_space<vmem>>, vector<8x1xi32>
    %2 = vector.broadcast %1 : vector<8x1xi32> to vector<8x128xi32>
    %3 = arith.cmpi eq, %2, %0 : vector<8x128xi32>
    %4 = arith.extui %3 : vector<8x128xi1> to vector<8x128xi32>
    %5 = arith.sitofp %4 : vector<8x128xi32> to vector<8x128xf32>
    %c0_1 = arith.constant 0 : index
    %c0_2 = arith.constant 0 : index
    %6 = vector.load %arg3[%c0_1, %c0_2] : memref<128x128xf32, #tpu.memory_space<vmem>>, vector<128x128xf32>
    %cst = arith.constant dense<0.000000e+00> : vector<8x128xf32>
    %7 = tpu.matmul %5, %6, %cst {dimension_numbers = #tpu.dot_dimension_numbers<[1], [0], [0], [1], [0, 0, 1, 1], [], []>, precision = #tpu.contract_precision<fp32>} : vector<8x128xf32>, vector<128x128xf32>, vector<8x128xf32> -> vector<8x128xf32>
    %c0_3 = arith.constant 0 : index
    %c0_4 = arith.constant 0 : index
    %8 = vector.load %arg1[%c0_3, %c0_4] : memref<8x128xf32, #tpu.memory_space<vmem>>, vector<8x128xf32>
    %9 = arith.subf %8, %7 : vector<8x128xf32>
    %10 = arith.mulf %9, %9 : vector<8x128xf32>
    %cst_5 = arith.constant dense<0.000000e+00> : vector<8xf32>
    %11 = vector.multi_reduction <add>, %10, %cst_5 [1] : vector<8x128xf32> to vector<8xf32>
    %12 = vector.shape_cast %11 : vector<8xf32> to vector<8x1xf32>
    %cst_6 = arith.constant 9.99999996E-13 : f32
    %cst_7 = arith.constant 9.99999995E+11 : f32
    %13 = vector.broadcast %cst_6 : f32 to vector<8x1xf32>
    %14 = arith.maximumf %13, %12 : vector<8x1xf32>
    %15 = vector.broadcast %cst_7 : f32 to vector<8x1xf32>
    %16 = arith.minimumf %15, %14 : vector<8x1xf32>
    %c0_8 = arith.constant 0 : index
    %c0_9 = arith.constant 0 : index
    %17 = vector.load %arg4[%c0_8, %c0_9] : memref<8x1xf32, #tpu.memory_space<vmem>>, vector<8x1xf32>
    tpu.vector_store %arg4[%c0_8, %c0_9], %16 {strides = array<i32>} : memref<8x1xf32, #tpu.memory_space<vmem>>, vector<8x1xf32>,
    return
  }
  func.func @transform_0(%arg0: i32) -> (i32, i32) {
    %c0_i32 = arith.constant 0 : i32
    %c0_i32_0 = arith.constant 0 : i32
    return %arg0, %c0_i32 : i32, i32
  }
  func.func @transform_1(%arg0: i32) -> (i32, i32) {
    %c0_i32 = arith.constant 0 : i32
    %c0_i32_0 = arith.constant 0 : i32
    return %arg0, %c0_i32 : i32, i32
  }
  func.func @transform_2(%arg0: i32) -> (i32, i32) {
    %c0_i32 = arith.constant 0 : i32
    %c0_i32_0 = arith.constant 0 : i32
    %c0_i32_1 = arith.constant 0 : i32
    return %c0_i32, %c0_i32_0 : i32, i32
  }
  func.func @transform_3(%arg0: i32) -> (i32, i32) {
    %c0_i32 = arith.constant 0 : i32
    %c0_i32_0 = arith.constant 0 : i32
    return %arg0, %c0_i32 : i32, i32
  }
}

</mosaic_0001>

<llo_original>
// kernel: tpu_custom_call.1
$region0: #{tpu_custom_call.1}
  #allocation0 [shape = 'u32[]', space=smem, size = 0x4, offset = 0x4, fixed_abs, tag = 'smem constant byte address 0x4 - core index']
  #allocation1 [shape = 'u32[72,128]{1,0:T(1,128)}', space=vmem, size = 0x9000, scoped, tag = 'internal scratch']
  %s0 = inlined_call_operand.vmem [shape: f32[8,128], index: 0, kind: input, shape index: {}]
  %s1 = inlined_call_operand.vmem [shape: s32[8,1], index: 1, kind: input, shape index: {}]
  %s2 = inlined_call_operand.hbm [shape: f32[128,128], index: 2, kind: input, shape index: {}]
  %s3 = inlined_call_operand.vmem [shape: f32[8,1], index: 3, kind: output, shape index: {}]
  %s4 = sld [smem:[#allocation0]]
  $region26: #{tpu_custom_call.1} parent=0
    _
  %s6 = ssub.s32 1, %s4
  %s7 = scalar_select 0, %s6, %s4
  $region1: #{tpu_custom_call.1} parent=0
    #allocation2 [shape = 'u8[65536]{0}', space=vmem, size = 0x10000, scoped, tag = 'input window, operand 2, single buffered']
    #allocation3 [shape = 's32[1]{0}', space=sflag, size = 0x4, scoped, tag = 'scoped memory for tpu_custom_call.1']
    %8 = vsyncpa [#allocation3], 0
    // Predicated region
    $region2: #{tpu_custom_call.1} parent=1 // pred_check
      _
    $region3: #{tpu_custom_call.1} parent=1 // pred_check_branch
      %10 = sbr.rel (0) target = $region5
    $region4: #{tpu_custom_call.1} parent=1 // pred_region
      _
    $region5: #{tpu_custom_call.1} parent=1 // pred_fallthru
      _
    // Predicated region
    $region6: #{tpu_custom_call.1} parent=1 // pred_check
      _
    $region7: #{tpu_custom_call.1} parent=1 // pred_check_branch
      %12 = sbr.rel (0) target = $region9
    $region8: #{tpu_custom_call.1} parent=1 // pred_region
      _
    $region9: #{tpu_custom_call.1} parent=1 // pred_fallthru
      _
    // Predicated region
    $region10: #{tpu_custom_call.1} parent=1 // pred_check
      _
    $region11: #{tpu_custom_call.1} parent=1 // pred_check_branch
      %14 = sbr.rel (0) target = $region13
    $region12: #{tpu_custom_call.1} parent=1 // pred_region
      %16 = vsyncadd [#allocation3], 0
      %s17 = sshll.u32 %s2, 4
      %s18 = int_to_ptr.hbm [resolvable:$true] %s17
      %s19 = sshll.u32 [#allocation2], 4
      %s20 = int_to_ptr.vmem [resolvable:$true] %s19
      %25 = dma.hbm_to_vmem [thread:$0]  %s18, 2048, %s20, [#allocation3], 128, 128, 8
    $region13: #{tpu_custom_call.1} parent=1 // pred_fallthru
      _
    // Predicated region
    $region14: #{tpu_custom_call.1} parent=1 // pred_check
      _
    $region15: #{tpu_custom_call.1} parent=1 // pred_check_branch
      %27 = sbr.rel (0) target = $region17
    $region16: #{tpu_custom_call.1} parent=1 // pred_region
      %29 = dma.done [#allocation3], 2048
    $region17: #{tpu_custom_call.1} parent=1 // pred_fallthru
      _
    %v30 = vlaneseq
    %v31 = vand.u32 %v30, 127
    %v32 = vld [vmem:[%s1] sm:$0xff]
    %33 = vset.pattern.permute.xlu0 0
    %34 = vperm.xlu0 %33, %v32
    %v35 = vpop.permute.xlu0 %34
    %vm36 = vcmp.eq.s32.totalorder %v35, %v31
    %v37 = vsel %vm36, 1, 0
    %v38 = vcvt.s32.f32 %v37
    %v39 = vld [vmem:[#allocation2] sm:$0xff]
    %v40 = vld [vmem:[#allocation2 + $0x8] sm:$0xff]
    %v41 = vld [vmem:[#allocation2 + $0x10] sm:$0xff]
    %v42 = vld [vmem:[#allocation2 + $0x18] sm:$0xff]
    %v43 = vld [vmem:[#allocation2 + $0x20] sm:$0xff]
    %v44 = vld [vmem:[#allocation2 + $0x28] sm:$0xff]
    %v45 = vld [vmem:[#allocation2 + $0x30] sm:$0xff]
    %v46 = vld [vmem:[#allocation2 + $0x38] sm:$0xff]
    %v47 = vld [vmem:[#allocation2 + $0x40] sm:$0xff]
    %v48 = vld [vmem:[#allocation2 + $0x48] sm:$0xff]
    %v49 = vld [vmem:[#allocation2 + $0x50] sm:$0xff]
    %v50 = vld [vmem:[#allocation2 + $0x58] sm:$0xff]
    %v51 = vld [vmem:[#allocation2 + $0x60] sm:$0xff]
    %v52 = vld [vmem:[#allocation2 + $0x68] sm:$0xff]
    %v53 = vld [vmem:[#allocation2 + $0x70] sm:$0xff]
    %v54 = vld [vmem:[#allocation2 + $0x78] sm:$0xff]
    %v55 = vand.u32 %v54, 4294901760
    %56 = vmatpush.msra.mxu0 %v55
    %v57 = vand.u32 %v53, 4294901760
    %58 = vmatpush.msra.mxu0 %v57
    %v59 = vand.u32 %v52, 4294901760
    %60 = vmatpush.msra.mxu0 %v59
    %v61 = vand.u32 %v51, 4294901760
    %62 = vmatpush.msra.mxu0 %v61
    %v63 = vand.u32 %v50, 4294901760
    %64 = vmatpush.msra.mxu0 %v63
    %v65 = vand.u32 %v49, 4294901760
    %66 = vmatpush.msra.mxu0 %v65
    %v67 = vand.u32 %v48, 4294901760
    %68 = vmatpush.msra.mxu0 %v67
    %v69 = vand.u32 %v47, 4294901760
    %70 = vmatpush.msra.mxu0 %v69
    %v71 = vand.u32 %v46, 4294901760
    %72 = vmatpush.msra.mxu0 %v71
    %v73 = vand.u32 %v45, 4294901760
    %74 = vmatpush.msra.mxu0 %v73
    %v75 = vand.u32 %v44, 4294901760
    %76 = vmatpush.msra.mxu0 %v75
    %v77 = vand.u32 %v43, 4294901760
    %78 = vmatpush.msra.mxu0 %v77
    %v79 = vand.u32 %v42, 4294901760
    %80 = vmatpush.msra.mxu0 %v79
    %v81 = vand.u32 %v41, 4294901760
    %82 = vmatpush.msra.mxu0 %v81
    %v83 = vand.u32 %v40, 4294901760
    %84 = vmatpush.msra.mxu0 %v83
    %v85 = vand.u32 %v39, 4294901760
    %86 = vmatpush.msra.mxu0 %v85
    %v87 = vand.u32 %v38, 4294901760
    %v88 = vsub.f32 %v38, %v87
    %v89 = vand.u32 %v88, 4294901760
    %v90 = vsub.f32 %v88, %v89
    %v91 = vand.u32 %v90, 4294901760
    %92 = vmatmul.f32.gmra.mxu0 %v91
    %v93 = vpop.f32.mrf.mxu0
    %v94 = vadd.f32 0.0, %v93
    %95 = vdwg.mxu0
    %v96 = vand.u32 %v54, 4294901760
    %v97 = vsub.f32 %v54, %v96
    %v98 = vand.u32 %v97, 4294901760
    %v99 = vsub.f32 %v97, %v98
    %v100 = vand.u32 %v99, 4294901760
    %101 = vmatpush.msra.mxu0 %v100
    %v102 = vand.u32 %v53, 4294901760
    %v103 = vsub.f32 %v53, %v102
    %v104 = vand.u32 %v103, 4294901760
    %v105 = vsub.f32 %v103, %v104
    %v106 = vand.u32 %v105, 4294901760
    %107 = vmatpush.msra.mxu0 %v106
    %v108 = vand.u32 %v52, 4294901760
    %v109 = vsub.f32 %v52, %v108
    %v110 = vand.u32 %v109, 4294901760
    %v111 = vsub.f32 %v109, %v110
    %v112 = vand.u32 %v111, 4294901760
    %113 = vmatpush.msra.mxu0 %v112
    %v114 = vand.u32 %v51, 4294901760
    %v115 = vsub.f32 %v51, %v114
    %v116 = vand.u32 %v115, 4294901760
    %v117 = vsub.f32 %v115, %v116
    %v118 = vand.u32 %v117, 4294901760
    %119 = vmatpush.msra.mxu0 %v118
    %v120 = vand.u32 %v50, 4294901760
    %v121 = vsub.f32 %v50, %v120
    %v122 = vand.u32 %v121, 4294901760
    %v123 = vsub.f32 %v121, %v122
    %v124 = vand.u32 %v123, 4294901760
    %125 = vmatpush.msra.mxu0 %v124
    %v126 = vand.u32 %v49, 4294901760
    %v127 = vsub.f32 %v49, %v126
    %v128 = vand.u32 %v127, 4294901760
    %v129 = vsub.f32 %v127, %v128
    %v130 = vand.u32 %v129, 4294901760
    %131 = vmatpush.msra.mxu0 %v130
    %v132 = vand.u32 %v48, 4294901760
    %v133 = vsub.f32 %v48, %v132
    %v134 = vand.u32 %v133, 4294901760
    %v135 = vsub.f32 %v133, %v134
    %v136 = vand.u32 %v135, 4294901760
    %137 = vmatpush.msra.mxu0 %v136
    %v138 = vand.u32 %v47, 4294901760
    %v139 = vsub.f32 %v47, %v138
    %v140 = vand.u32 %v139, 4294901760
    %v141 = vsub.f32 %v139, %v140
    %v142 = vand.u32 %v141, 4294901760
    %143 = vmatpush.msra.mxu0 %v142
    %v144 = vand.u32 %v46, 4294901760
    %v145 = vsub.f32 %v46, %v144
    %v146 = vand.u32 %v145, 4294901760
    %v147 = vsub.f32 %v145, %v146
    %v148 = vand.u32 %v147, 4294901760
    %149 = vmatpush.msra.mxu0 %v148
    %v150 = vand.u32 %v45, 4294901760
    %v151 = vsub.f32 %v45, %v150
    %v152 = vand.u32 %v151, 4294901760
    %v153 = vsub.f32 %v151, %v152
    %v154 = vand.u32 %v153, 4294901760
    %155 = vmatpush.msra.mxu0 %v154
    %v156 = vand.u32 %v44, 4294901760
    %v157 = vsub.f32 %v44, %v156
    %v158 = vand.u32 %v157, 4294901760
    %v159 = vsub.f32 %v157, %v158
    %v160 = vand.u32 %v159, 4294901760
    %161 = vmatpush.msra.mxu0 %v160
    %v162 = vand.u32 %v43, 4294901760
    %v163 = vsub.f32 %v43, %v162
    %v164 = vand.u32 %v163, 4294901760
    %v165 = vsub.f32 %v163, %v164
    %v166 = vand.u32 %v165, 4294901760
    %167 = vmatpush.msra.mxu0 %v166
    %v168 = vand.u32 %v42, 4294901760
    %v169 = vsub.f32 %v42, %v168
    %v170 = vand.u32 %v169, 4294901760
    %v171 = vsub.f32 %v169, %v170
    %v172 = vand.u32 %v171, 4294901760
    %173 = vmatpush.msra.mxu0 %v172
    %v174 = vand.u32 %v41, 4294901760
    %v175 = vsub.f32 %v41, %v174
    %v176 = vand.u32 %v175, 4294901760
    %v177 = vsub.f32 %v175, %v176
    %v178 = vand.u32 %v177, 4294901760
    %179 = vmatpush.msra.mxu0 %v178
    %v180 = vand.u32 %v40, 4294901760
    %v181 = vsub.f32 %v40, %v180
    %v182 = vand.u32 %v181, 4294901760
    %v183 = vsub.f32 %v181, %v182
    %v184 = vand.u32 %v183, 4294901760
    %185 = vmatpush.msra.mxu0 %v184
    %v186 = vand.u32 %v39, 4294901760
    %v187 = vsub.f32 %v39, %v186
    %v188 = vand.u32 %v187, 4294901760
    %v189 = vsub.f32 %v187, %v188
    %v190 = vand.u32 %v189, 4294901760
    %191 = vmatpush.msra.mxu0 %v190
    %v192 = vand.u32 %v38, 4294901760
    %193 = vmatmul.f32.gmra.mxu0 %v192
    %v194 = vpop.f32.mrf.mxu0
    %v195 = vadd.f32 %v94, %v194
    %196 = vdwg.mxu0
    %v197 = vand.u32 %v54, 4294901760
    %v198 = vsub.f32 %v54, %v197
    %199 = vmatpush.msra.mxu0 %v198
    %v200 = vand.u32 %v53, 4294901760
    %v201 = vsub.f32 %v53, %v200
    %202 = vmatpush.msra.mxu0 %v201
    %v203 = vand.u32 %v52, 4294901760
    %v204 = vsub.f32 %v52, %v203
    %205 = vmatpush.msra.mxu0 %v204
    %v206 = vand.u32 %v51, 4294901760
    %v207 = vsub.f32 %v51, %v206
    %208 = vmatpush.msra.mxu0 %v207
    %v209 = vand.u32 %v50, 4294901760
    %v210 = vsub.f32 %v50, %v209
    %211 = vmatpush.msra.mxu0 %v210
    %v212 = vand.u32 %v49, 4294901760
    %v213 = vsub.f32 %v49, %v212
    %214 = vmatpush.msra.mxu0 %v213
    %v215 = vand.u32 %v48, 4294901760
    %v216 = vsub.f32 %v48, %v215
    %217 = vmatpush.msra.mxu0 %v216
    %v218 = vand.u32 %v47, 4294901760
    %v219 = vsub.f32 %v47, %v218
    %220 = vmatpush.msra.mxu0 %v219
    %v221 = vand.u32 %v46, 4294901760
    %v222 = vsub.f32 %v46, %v221
    %223 = vmatpush.msra.mxu0 %v222
    %v224 = vand.u32 %v45, 4294901760
    %v225 = vsub.f32 %v45, %v224
    %226 = vmatpush.msra.mxu0 %v225
    %v227 = vand.u32 %v44, 4294901760
    %v228 = vsub.f32 %v44, %v227
    %229 = vmatpush.msra.mxu0 %v228
    %v230 = vand.u32 %v43, 4294901760
    %v231 = vsub.f32 %v43, %v230
    %232 = vmatpush.msra.mxu0 %v231
    %v233 = vand.u32 %v42, 4294901760
    %v234 = vsub.f32 %v42, %v233
    %235 = vmatpush.msra.mxu0 %v234
    %v236 = vand.u32 %v41, 4294901760
    %v237 = vsub.f32 %v41, %v236
    %238 = vmatpush.msra.mxu0 %v237
    %v239 = vand.u32 %v40, 4294901760
    %v240 = vsub.f32 %v40, %v239
    %241 = vmatpush.msra.mxu0 %v240
    %v242 = vand.u32 %v39, 4294901760
    %v243 = vsub.f32 %v39, %v242
    %244 = vmatpush.msra.mxu0 %v243
    %v245 = vand.u32 %v38, 4294901760
    %v246 = vsub.f32 %v38, %v245
    %247 = vmatmul.f32.gmra.mxu0 %v246
    %v248 = vpop.f32.mrf.mxu0
    %v249 = vadd.f32 %v195, %v248
    %250 = vdwg.mxu0
    %v251 = vand.u32 %v54, 4294901760
    %252 = vmatpush.msra.mxu0 %v251
    %v253 = vand.u32 %v53, 4294901760
    %254 = vmatpush.msra.mxu0 %v253
    %v255 = vand.u32 %v52, 4294901760
    %256 = vmatpush.msra.mxu0 %v255
    %v257 = vand.u32 %v51, 4294901760
    %258 = vmatpush.msra.mxu0 %v257
    %v259 = vand.u32 %v50, 4294901760
    %260 = vmatpush.msra.mxu0 %v259
    %v261 = vand.u32 %v49, 4294901760
    %262 = vmatpush.msra.mxu0 %v261
    %v263 = vand.u32 %v48, 4294901760
    %264 = vmatpush.msra.mxu0 %v263
    %v265 = vand.u32 %v47, 4294901760
    %266 = vmatpush.msra.mxu0 %v265
    %v267 = vand.u32 %v46, 4294901760
    %268 = vmatpush.msra.mxu0 %v267
    %v269 = vand.u32 %v45, 4294901760
    %270 = vmatpush.msra.mxu0 %v269
    %v271 = vand.u32 %v44, 4294901760
    %272 = vmatpush.msra.mxu0 %v271
    %v273 = vand.u32 %v43, 4294901760
    %274 = vmatpush.msra.mxu0 %v273
    %v275 = vand.u32 %v42, 4294901760
    %276 = vmatpush.msra.mxu0 %v275
    %v277 = vand.u32 %v41, 4294901760
    %278 = vmatpush.msra.mxu0 %v277
    %v279 = vand.u32 %v40, 4294901760
    %280 = vmatpush.msra.mxu0 %v279
    %v281 = vand.u32 %v39, 4294901760
    %282 = vmatpush.msra.mxu0 %v281
    %v283 = vand.u32 %v38, 4294901760
    %v284 = vsub.f32 %v38, %v283
    %v285 = vand.u32 %v284, 4294901760
    %286 = vmatmul.f32.gmra.mxu0 %v285
    %v287 = vpop.f32.mrf.mxu0
    %v288 = vadd.f32 %v249, %v287
    %289 = vdwg.mxu0
    %v290 = vand.u32 %v54, 4294901760
    %v291 = vsub.f32 %v54, %v290
    %v292 = vand.u32 %v291, 4294901760
    %293 = vmatpush.msra.mxu0 %v292
    %v294 = vand.u32 %v53, 4294901760
    %v295 = vsub.f32 %v53, %v294
    %v296 = vand.u32 %v295, 4294901760
    %297 = vmatpush.msra.mxu0 %v296
    %v298 = vand.u32 %v52, 4294901760
    %v299 = vsub.f32 %v52, %v298
    %v300 = vand.u32 %v299, 4294901760
    %301 = vmatpush.msra.mxu0 %v300
    %v302 = vand.u32 %v51, 4294901760
    %v303 = vsub.f32 %v51, %v302
    %v304 = vand.u32 %v303, 4294901760
    %305 = vmatpush.msra.mxu0 %v304
    %v306 = vand.u32 %v50, 4294901760
    %v307 = vsub.f32 %v50, %v306
    %v308 = vand.u32 %v307, 4294901760
    %309 = vmatpush.msra.mxu0 %v308
    %v310 = vand.u32 %v49, 4294901760
    %v311 = vsub.f32 %v49, %v310
    %v312 = vand.u32 %v311, 4294901760
    %313 = vmatpush.msra.mxu0 %v312
    %v314 = vand.u32 %v48, 4294901760
    %v315 = vsub.f32 %v48, %v314
    %v316 = vand.u32 %v315, 4294901760
    %317 = vmatpush.msra.mxu0 %v316
    %v318 = vand.u32 %v47, 4294901760
    %v319 = vsub.f32 %v47, %v318
    %v320 = vand.u32 %v319, 4294901760
    %321 = vmatpush.msra.mxu0 %v320
    %v322 = vand.u32 %v46, 4294901760
    %v323 = vsub.f32 %v46, %v322
    %v324 = vand.u32 %v323, 4294901760
    %325 = vmatpush.msra.mxu0 %v324
    %v326 = vand.u32 %v45, 4294901760
    %v327 = vsub.f32 %v45, %v326
    %v328 = vand.u32 %v327, 4294901760
    %329 = vmatpush.msra.mxu0 %v328
    %v330 = vand.u32 %v44, 4294901760
    %v331 = vsub.f32 %v44, %v330
    %v332 = vand.u32 %v331, 4294901760
    %333 = vmatpush.msra.mxu0 %v332
    %v334 = vand.u32 %v43, 4294901760
    %v335 = vsub.f32 %v43, %v334
    %v336 = vand.u32 %v335, 4294901760
    %337 = vmatpush.msra.mxu0 %v336
    %v338 = vand.u32 %v42, 4294901760
    %v339 = vsub.f32 %v42, %v338
    %v340 = vand.u32 %v339, 4294901760
    %341 = vmatpush.msra.mxu0 %v340
    %v342 = vand.u32 %v41, 4294901760
    %v343 = vsub.f32 %v41, %v342
    %v344 = vand.u32 %v343, 4294901760
    %345 = vmatpush.msra.mxu0 %v344
    %v346 = vand.u32 %v40, 4294901760
    %v347 = vsub.f32 %v40, %v346
    %v348 = vand.u32 %v347, 4294901760
    %349 = vmatpush.msra.mxu0 %v348
    %v350 = vand.u32 %v39, 4294901760
    %v351 = vsub.f32 %v39, %v350
    %v352 = vand.u32 %v351, 4294901760
    %353 = vmatpush.msra.mxu0 %v352
    %v354 = vand.u32 %v38, 4294901760
    %355 = vmatmul.f32.gmra.mxu0 %v354
    %v356 = vpop.f32.mrf.mxu0
    %v357 = vadd.f32 %v288, %v356
    %358 = vdwg.mxu0
    %v359 = vand.u32 %v54, 4294901760
    %360 = vmatpush.msra.mxu0 %v359
    %v361 = vand.u32 %v53, 4294901760
    %362 = vmatpush.msra.mxu0 %v361
    %v363 = vand.u32 %v52, 4294901760
    %364 = vmatpush.msra.mxu0 %v363
    %v365 = vand.u32 %v51, 4294901760
    %366 = vmatpush.msra.mxu0 %v365
    %v367 = vand.u32 %v50, 4294901760
    %368 = vmatpush.msra.mxu0 %v367
    %v369 = vand.u32 %v49, 4294901760
    %370 = vmatpush.msra.mxu0 %v369
    %v371 = vand.u32 %v48, 4294901760
    %372 = vmatpush.msra.mxu0 %v371
    %v373 = vand.u32 %v47, 4294901760
    %374 = vmatpush.msra.mxu0 %v373
    %v375 = vand.u32 %v46, 4294901760
    %376 = vmatpush.msra.mxu0 %v375
    %v377 = vand.u32 %v45, 4294901760
    %378 = vmatpush.msra.mxu0 %v377
    %v379 = vand.u32 %v44, 4294901760
    %380 = vmatpush.msra.mxu0 %v379
    %v381 = vand.u32 %v43, 4294901760
    %382 = vmatpush.msra.mxu0 %v381
    %v383 = vand.u32 %v42, 4294901760
    %384 = vmatpush.msra.mxu0 %v383
    %v385 = vand.u32 %v41, 4294901760
    %386 = vmatpush.msra.mxu0 %v385
    %v387 = vand.u32 %v40, 4294901760
    %388 = vmatpush.msra.mxu0 %v387
    %v389 = vand.u32 %v39, 4294901760
    %390 = vmatpush.msra.mxu0 %v389
    %v391 = vand.u32 %v38, 4294901760
    %392 = vmatmul.f32.gmra.mxu0 %v391
    %v393 = vpop.f32.mrf.mxu0
    %v394 = vadd.f32 %v357, %v393
    %395 = vdwg.mxu0
    %v396 = vld [vmem:[%s0] sm:$0xff]
    %v397 = vsub.f32 %v396, %v394
    %v398 = vmul.f32 %v397, %v397
    %399 = vadd.xlane.f32.xlu0 %v398
    %v400 = vpop.xlane.xlu0 %399
    %v401 = vmax.f32 %v400, 1e-12
    %v402 = vmin.f32 %v401, 1e+12
    %vm403 = vcmask 7168
    %404 = vst.msk [vmem:[%s3] sm:$0xff] %vm403, %v402
    // Predicated region
    $region18: #{tpu_custom_call.1} parent=1 // pred_check
      _
    $region19: #{tpu_custom_call.1} parent=1 // pred_check_branch
      %406 = sbr.rel (0) target = $region21
    $region20: #{tpu_custom_call.1} parent=1 // pred_region
      _
    $region21: #{tpu_custom_call.1} parent=1 // pred_fallthru
      _
    // Predicated region
    $region22: #{tpu_custom_call.1} parent=1 // pred_check
      _
    $region23: #{tpu_custom_call.1} parent=1 // pred_check_branch
      %408 = sbr.rel (0) target = $region25
    $region24: #{tpu_custom_call.1} parent=1 // pred_region
      _
    $region25: #{tpu_custom_call.1} parent=1 // pred_fallthru
      _
    %409 = vsyncpa [#allocation3], 1

</llo_original>
